<compile_context>
chip_gen: v5e
topology: v5e:2x2
jax: 0.10.0
libtpu: 0.0.40
codegen_flags: <defaults>
</compile_context>

<pallas_src>
import functools

import jax
import jax.numpy as jnp
from jax.experimental import pallas as pl
from jax.experimental.pallas import tpu as pltpu


# ----------------------------------------------------------------------------
# Fused kernel: 2-layer GIN + graphlet pooling + normalized-estimate readout.
# grid = (2, num_row_tiles)   (phase, row tile), both axes sequential.
# ----------------------------------------------------------------------------
def _fused_kary_gnn_kernel(
    ahat_ref, xw1_ref, ghg_ref, sel_ref,
    b1a_ref, w1b_ref, b1b_ref,
    w2a_ref, b2a_ref, w2b_ref, b2b_ref,
    out_ref,
    h_ref, gacc_ref,
    *, tile_rows: int, graphlet_sz: int, ahat_resident: bool, cast_bf16: bool):
  phase = pl.program_id(0)
  tile = pl.program_id(1)
  num_tiles = pl.num_programs(1)
  row0 = pl.multiple_of(tile * tile_rows, tile_rows)

  # A_hat lives in HBM/VMEM as int8; cast to the aggregation compute dtype
  # right after the (tile) load.
  if ahat_resident:
    a_tile = ahat_ref[pl.ds(row0, tile_rows), :]        # slice of resident copy
  else:
    a_tile = ahat_ref[...]                              # streamed (TM, N) tile
  a_tile = a_tile.astype(jnp.float32)
  if cast_bf16:
    a_tile = a_tile.astype(jnp.bfloat16)

  # -------- phase 0: GIN layer 1 for this row tile -> VMEM scratch h --------
  @pl.when(phase == 0)
  def _layer1():
    # Layer 1 re-associated as A_hat @ (x @ W1a); xw1 is precomputed once in
    # the wrapper so this matmul is lane-dense (TM, N) x (N, H).
    agg = jnp.dot(a_tile, xw1_ref[...], preferred_element_type=jnp.float32)
    h = jnp.maximum(agg + b1a_ref[...], 0.0)
    h = jnp.dot(h, w1b_ref[...], preferred_element_type=jnp.float32)
    h = jnp.maximum(h + b1b_ref[...], 0.0)              # (TM, H)
    # Store h in its final (possibly bf16) dtype: phase 1 never re-casts the
    # whole (N, H) array per tile, and the scratch is half the bytes.
    h_ref[pl.ds(row0, tile_rows), :] = h.astype(h_ref.dtype)

  # -------- phase 1: GIN layer 2 + local MXU graphlet pooling + readout -----
  @pl.when(phase == 1)
  def _layer2_and_readout():
    h_all = h_ref[...]                                  # (N, H), compute dtype
    agg2 = jnp.dot(a_tile, h_all, preferred_element_type=jnp.float32)  # (TM,H)
    h2 = jnp.dot(agg2, w2a_ref[...], preferred_element_type=jnp.float32)
    h2 = jnp.maximum(h2 + b2a_ref[...], 0.0)
    nodes = jnp.dot(h2, w2b_ref[...], preferred_element_type=jnp.float32)
    nodes = nodes + b2b_ref[...]                        # (TM, D) vertex repr

    # Local graphlet pooling: sel is the tile-invariant (TM//k, TM) 0/1
    # selector passed as an input.  Each tile owns a disjoint graphlet range,
    # so this is a plain sliced store (no zero-init, no accumulator RMW).
    g_per_tile = tile_rows // graphlet_sz
    g0 = pl.multiple_of(tile * g_per_tile, g_per_tile)
    gacc_ref[pl.ds(g0, g_per_tile), :] = jnp.dot(
        sel_ref[...], nodes, preferred_element_type=jnp.float32)

    @pl.when(tile == num_tiles - 1)
    def _finalize():
      ghg = ghg_ref[...]                                       # (B, G)
      denom = jnp.sum(ghg, axis=-1, keepdims=True) + 1e-4      # (B, 1)
      normalized = ghg * pl.reciprocal(denom, approx=False)    # exact recip
      out_ref[...] = jnp.dot(normalized, gacc_ref[...],
                             preferred_element_type=jnp.float32
                             ).astype(out_ref.dtype)


# ----------------------------------------------------------------------------
# Glue: parameters, adjacency build, heuristics, forward wrapper
# ----------------------------------------------------------------------------
def init_gin_params(key, in_dim, hidden_dim, out_dim):
  ks = jax.random.split(key, 4)
  s = 0.1
  return {
      # layer 1 MLP: in_dim -> hidden -> hidden
      "w1a": s * jax.random.normal(ks[0], (in_dim, hidden_dim), jnp.float32),
      "b1a": jnp.zeros((1, hidden_dim), jnp.float32),
      "w1b": s * jax.random.normal(ks[1], (hidden_dim, hidden_dim), jnp.float32),
      "b1b": jnp.zeros((1, hidden_dim), jnp.float32),
      # layer 2 MLP: hidden -> hidden -> out_dim
      "w2a": s * jax.random.normal(ks[2], (hidden_dim, hidden_dim), jnp.float32),
      "b2a": jnp.zeros((1, hidden_dim), jnp.float32),
      "w2b": s * jax.random.normal(ks[3], (hidden_dim, out_dim), jnp.float32),
      "b2b": jnp.zeros((1, out_dim), jnp.float32),
  }


def build_ahat(edge_index, num_nodes, eps_gin=0.0):
  # TODO(synk): edge_index -> dense A_hat scatter-add is data-dependent and
  # stays in plain JAX glue (not expressible as a rectangular BlockSpec).
  src, dst = edge_index[0], edge_index[1]
  a = jnp.zeros((num_nodes, num_nodes), jnp.float32)
  a = a.at[dst, src].add(1.0)
  a = a + (1.0 + eps_gin) * jnp.eye(num_nodes, dtype=jnp.float32)
  return a


def _default_vmem_budget_bytes():
  # v4/v5e/v6e have 128 MiB physical VMEM -> raise the scoped cap toward
  # ~100 MiB; v7x has only 64 MiB -> stay at 48 MiB.  Unknown -> conservative.
  try:
    kind = jax.devices()[0].device_kind.lower()
  except Exception:  # pragma: no cover
    kind = ""
  if ("v7" in kind) or ("7x" in kind):
    return 48 << 20
  if any(t in kind for t in ("v4", "v5", "v6")):
    return 100 << 20
  return 48 << 20


def _pick_tile_rows(n, graphlet_sz, a_bytes, fixed_bytes, data_budget,
                    ahat_resident):
  """Largest row tile that divides N, is a multiple of graphlet_sz and 32
  (int8 sublane packing / aligned scratch slices) and — on the tiled path —
  keeps double-buffered A_hat tiles inside the VMEM data budget."""
  candidates = [tm for tm in range(32, min(n, 1024) + 1, 32)
                if n % tm == 0 and tm % graphlet_sz == 0]
  if not candidates:
    raise ValueError(
        "No valid tile_rows: need N divisible by a multiple of 32 that is "
        "also a multiple of graphlet_sz (pad N or pass tile_rows explicitly).")
  if ahat_resident:
    small = [tm for tm in candidates if tm <= 512]
    return max(small) if small else min(candidates)
  fitting = [tm for tm in candidates
             if fixed_bytes + 2 * tm * n * a_bytes <= data_budget]
  return max(fitting) if fitting else min(candidates)


def kary_gnn_forward(params, x, edge_index, graph_has_graphlet, graphlet_sz,
                     *, tile_rows=None, bf16_features=True,
                     force_tiled_ahat=False, vmem_budget_bytes=None):
  n, _ = x.shape
  b, g = graph_has_graphlet.shape
  hidden = params["w1a"].shape[1]
  d_out = params["w2b"].shape[1]
  assert n % graphlet_sz == 0
  assert g == n // graphlet_sz, "graph_has_graphlet must have N//k columns"

  if vmem_budget_bytes is None:
    vmem_budget_bytes = _default_vmem_budget_bytes()
  data_budget = int(0.85 * vmem_budget_bytes)

  compute_dtype = jnp.bfloat16 if bf16_features else jnp.float32
  feat_bytes = 2 if bf16_features else 4
  a_bytes = 1  # int8 A_hat storage

  # A_hat stored as int8: exact for small integer counts with eps_gin == 0
  # (the default); weighted edges / eps_gin != 0 would need f32 storage.
  ahat = build_ahat(edge_index, n).astype(jnp.int8)

  # Layer-1 re-association: precompute xw1 = x @ W1a once in XLA (tiny), so
  # the kernel's per-tile aggregation matmul is lane-dense.  (FP re-assoc.)
  xw1 = jnp.dot(x, params["w1a"],
                preferred_element_type=jnp.float32).astype(compute_dtype)

  # VMEM residents other than A_hat (rough upper bound, bytes).
  fixed_bytes = (
      n * hidden * feat_bytes            # xw1
      + n * hidden * feat_bytes          # h scratch
      + g * d_out * 4                    # graphlet accumulator
      + 3 * hidden * max(hidden, d_out) * 4   # w1b, w2a, w2b
      + b * g * 4 + b * d_out * 4        # ghg, out
      + (1 << 20))                       # biases / selector / misc slack

  ahat_resident = ((not force_tiled_ahat)
                   and (n * n * a_bytes + fixed_bytes <= data_budget))

  if tile_rows is None:
    tile_rows = _pick_tile_rows(n, graphlet_sz, a_bytes, fixed_bytes,
                                data_budget, ahat_resident)
  assert n % tile_rows == 0
  assert tile_rows % graphlet_sz == 0   # sliced graphlet-pool writes
  assert tile_rows % 32 == 0            # int8 sublanes / aligned scratch slices
  num_tiles = n // tile_rows
  rows_per_tile_g = tile_rows // graphlet_sz

  # Tile-invariant local pooling selector (TM//k, TM): sel[p, t] = 1 iff
  # t // k == p.  Precomputed once; no per-grid-step iota/compare chain.
  sel = (jnp.arange(tile_rows)[None, :] // graphlet_sz
         == jnp.arange(rows_per_tile_g)[:, None]).astype(jnp.float32)

  ghg = graph_has_graphlet.astype(jnp.float32)

  def whole(shape):
    return pl.BlockSpec(shape, lambda p, i, _s=len(shape): (0,) * _s)

  if ahat_resident:
    # Constant block index -> A_hat is DMA'd into VMEM once and reused by
    # both phases (halves total HBM traffic of the dominant stream).
    ahat_spec = whole(ahat.shape)
  else:
    ahat_spec = pl.BlockSpec((tile_rows, n), lambda p, i: (i, 0))

  in_specs = [
      ahat_spec,
      whole(xw1.shape),
      whole(ghg.shape),
      whole(sel.shape),
      whole(params["b1a"].shape),
      whole(params["w1b"].shape), whole(params["b1b"].shape),
      whole(params["w2a"].shape), whole(params["b2a"].shape),
      whole(params["w2b"].shape), whole(params["b2b"].shape),
  ]

  grid_spec = pltpu.PrefetchScalarGridSpec(
      num_scalar_prefetch=0,
      grid=(2, num_tiles),                       # (phase, row tile)
      in_specs=in_specs,
      out_specs=pl.BlockSpec((b, d_out), lambda p, i: (0, 0)),
      scratch_shapes=[
          pltpu.VMEM((n, hidden), compute_dtype),  # layer-1 output h
          pltpu.VMEM((g, d_out), jnp.float32),     # graphlet-pooled repr
      ])

  kernel = functools.partial(
      _fused_kary_gnn_kernel,
      tile_rows=tile_rows, graphlet_sz=graphlet_sz,
      ahat_resident=ahat_resident, cast_bf16=bf16_features)

  return pl.pallas_call(
      kernel,
      out_shape=jax.ShapeDtypeStruct((b, d_out), jnp.float32),
      grid_spec=grid_spec,
      compiler_params=pltpu.CompilerParams(
          # Row-tile axis shares the h scratch and the graphlet accumulator,
          # and phase 1 needs all of phase 0 -> both axes sequential.
          dimension_semantics=("arbitrary", "arbitrary"),
          vmem_limit_bytes=int(vmem_budget_bytes)),
  )(ahat, xw1, ghg, sel,
    params["b1a"], params["w1b"], params["b1b"],
    params["w2a"], params["b2a"], params["w2b"], params["b2b"])


# Pure-JAX f32 reference (module semantics) for verification.
def kary_gnn_reference(params, x, edge_index, graph_has_graphlet, graphlet_sz):
  n = x.shape[0]
  ahat = build_ahat(edge_index, n)
  agg = ahat @ x
  h = jnp.maximum(agg @ params["w1a"] + params["b1a"], 0.0)
  h = jnp.maximum(h @ params["w1b"] + params["b1b"], 0.0)
  agg2 = ahat @ h
  h2 = jnp.maximum(agg2 @ params["w2a"] + params["b2a"], 0.0)
  out = h2 @ params["w2b"] + params["b2b"]
  graphlets_repr = out.reshape(-1, graphlet_sz, out.shape[-1]).sum(axis=1)
  eps = 0.0001
  normalized = graph_has_graphlet / (
      graph_has_graphlet.sum(axis=-1, keepdims=True) + eps)
  return normalized @ graphlets_repr


if __name__ == "__main__":
  key = jax.random.PRNGKey(0)
  k_x, k_ghg, k_params = jax.random.split(key, 3)

  # Small, lane/sublane/int8-friendly demo shapes.
  graphlet_sz = 4                 # k
  num_graphlets = 32              # G
  num_nodes = num_graphlets * graphlet_sz   # N = 128
  in_dim = 16
  hidden_dim = 128                # lane-dense hidden
  out_dim = 128                   # lane-dense output -> unmasked vector stores
  batch_graphs = 8                # B (sublane-dense (B, D) output)

  x = jax.random.normal(k_x, (num_nodes, in_dim), jnp.float32)

  # Edge index: bidirectional ring inside each graphlet (deterministic).
  srcs, dsts = [], []
  for gi in range(num_graphlets):
    base = gi * graphlet_sz
    for i in range(graphlet_sz):
      u = base + i
      v = base + (i + 1) % graphlet_sz
      srcs += [u, v]
      dsts += [v, u]
  edge_index = jnp.array([srcs, dsts], dtype=jnp.int32)     # (2, 256)

  # Graphlet occurrence counts per graph (non-negative).
  graph_has_graphlet = jax.random.randint(
      k_ghg, (batch_graphs, num_graphlets), 0, 5).astype(jnp.float32)

  params = init_gin_params(k_params, in_dim, hidden_dim, out_dim)

  ref = kary_gnn_reference(params, x, edge_index, graph_has_graphlet,
                           graphlet_sz)

  # 1) f32 features, multi-tile grid, resident int8 A_hat (tight check).
  out_f32 = kary_gnn_forward(params, x, edge_index, graph_has_graphlet,
                             graphlet_sz, tile_rows=64, bf16_features=False)
  out_f32 = jax.block_until_ready(out_f32)
  assert out_f32.shape == (batch_graphs, out_dim)
  assert jnp.allclose(out_f32, ref, atol=2e-3, rtol=2e-3), (
      "Pallas f32/resident output does not match reference")

  # 2) f32 features, forced row-tiled A_hat stream (exercises the large-N
  #    HBM-streaming path; tight check).
  out_tiled = kary_gnn_forward(params, x, edge_index, graph_has_graphlet,
                               graphlet_sz, tile_rows=64, bf16_features=False,
                               force_tiled_ahat=True)
  out_tiled = jax.block_until_ready(out_tiled)
  assert jnp.allclose(out_tiled, ref, atol=2e-3, rtol=2e-3), (
      "Pallas f32/tiled output does not match reference")

  # 3) Default fast path: bf16 aggregation operands + bf16 h scratch, auto
  #    tile selection (collapses to a single row tile at this small N).
  out_bf16 = kary_gnn_forward(params, x, edge_index, graph_has_graphlet,
                              graphlet_sz)
  out_bf16 = jax.block_until_ready(out_bf16)
  assert out_bf16.shape == (batch_graphs, out_dim)
  assert jnp.allclose(out_bf16, ref, atol=1.5e-1, rtol=1e-1), (
      "Pallas bf16 fast-path output too far from reference")

  print("KERNEL_OK")
</pallas_src>

<mosaic_0001>
module attributes {stable_mosaic.version = 11 : i64} {
  func.func @_fused_kary_gnn_kernel(%arg0: i32, %arg1: i32, %arg2: memref<128x128xi8, #tpu.memory_space<vmem>>, %arg3: memref<128x128xf32, #tpu.memory_space<vmem>>, %arg4: memref<8x32xf32, #tpu.memory_space<vmem>>, %arg5: memref<16x64xf32, #tpu.memory_space<vmem>>, %arg6: memref<1x128xf32, #tpu.memory_space<vmem>>, %arg7: memref<128x128xf32, #tpu.memory_space<vmem>>, %arg8: memref<1x128xf32, #tpu.memory_space<vmem>>, %arg9: memref<128x128xf32, #tpu.memory_space<vmem>>, %arg10: memref<1x128xf32, #tpu.memory_space<vmem>>, %arg11: memref<128x128xf32, #tpu.memory_space<vmem>>, %arg12: memref<1x128xf32, #tpu.memory_space<vmem>>, %arg13: memref<8x128xf32, #tpu.memory_space<vmem>>, %arg14: memref<128x128xf32, #tpu.memory_space<vmem>>, %arg15: memref<32x128xf32, #tpu.memory_space<vmem>>) attributes {dimension_semantics = [#tpu.dimension_semantics<arbitrary>, #tpu.dimension_semantics<arbitrary>], iteration_bounds = array<i64: 2, 2>, scalar_prefetch = 0 : i64, scratch_operands = 2 : i64, tpu.core_type = #tpu.core_type<tc>, window_params = [{pipeline_mode = #tpu.pipeline_mode<synchronous>, transform_indices = @transform_0, window_bounds = array<i64: 128, 128>}, {pipeline_mode = #tpu.pipeline_mode<synchronous>, transform_indices = @transform_1, window_bounds = array<i64: 128, 128>}, {pipeline_mode = #tpu.pipeline_mode<synchronous>, transform_indices = @transform_2, window_bounds = array<i64: 8, 32>}, {pipeline_mode = #tpu.pipeline_mode<synchronous>, transform_indices = @transform_3, window_bounds = array<i64: 16, 64>}, {pipeline_mode = #tpu.pipeline_mode<synchronous>, transform_indices = @transform_4, window_bounds = array<i64: 1, 128>}, {pipeline_mode = #tpu.pipeline_mode<synchronous>, transform_indices = @transform_5, window_bounds = array<i64: 128, 128>}, {pipeline_mode = #tpu.pipeline_mode<synchronous>, transform_indices = @transform_6, window_bounds = array<i64: 1, 128>}, {pipeline_mode = #tpu.pipeline_mode<synchronous>, transform_indices = @transform_7, window_bounds = array<i64: 128, 128>}, {pipeline_mode = #tpu.pipeline_mode<synchronous>, transform_indices = @transform_8, window_bounds = array<i64: 1, 128>}, {pipeline_mode = #tpu.pipeline_mode<synchronous>, transform_indices = @transform_9, window_bounds = array<i64: 128, 128>}, {pipeline_mode = #tpu.pipeline_mode<synchronous>, transform_indices = @transform_10, window_bounds = array<i64: 1, 128>}, {pipeline_mode = #tpu.pipeline_mode<synchronous>, transform_indices = @transform_11, window_bounds = array<i64: 8, 128>}]} {
    %c64_i32 = arith.constant 64 : i32
    %0 = arith.muli %arg1, %c64_i32 : i32
    %1 = tpu.assume_multiple %0, 64 : i32
    %2 = arith.index_cast %1 : i32 to index
    %c0 = arith.constant 0 : index
    %3 = vector.load %arg2[%2, %c0] : memref<128x128xi8, #tpu.memory_space<vmem>>, vector<64x128xi8>
    %4 = arith.sitofp %3 : vector<64x128xi8> to vector<64x128xf32>
    %c0_i32 = arith.constant 0 : i32
    %5 = arith.cmpi eq, %arg0, %c0_i32 : i32
    %6 = arith.extui %5 : i1 to i32
    %c0_i32_0 = arith.constant 0 : i32
    %7 = arith.cmpi ne, %6, %c0_i32_0 : i32
    scf.if %7 {
      %c0_2 = arith.constant 0 : index
      %c0_3 = arith.constant 0 : index
      %11 = vector.load %arg3[%c0_2, %c0_3] : memref<128x128xf32, #tpu.memory_space<vmem>>, vector<128x128xf32>
      %cst = arith.constant dense<0.000000e+00> : vector<64x128xf32>
      %12 = tpu.matmul %4, %11, %cst {dimension_numbers = #tpu.dot_dimension_numbers<[1], [0], [0], [1], [0, 0, 1, 1], [], []>} : vector<64x128xf32>, vector<128x128xf32>, vector<64x128xf32> -> vector<64x128xf32>
      %c0_4 = arith.constant 0 : index
      %c0_5 = arith.constant 0 : index
      %13 = vector.load %arg6[%c0_4, %c0_5] : memref<1x128xf32, #tpu.memory_space<vmem>>, vector<1x128xf32>
      %14 = vector.broadcast %13 : vector<1x128xf32> to vector<64x128xf32>
      %15 = arith.addf %12, %14 : vector<64x128xf32>
      %cst_6 = arith.constant 0.000000e+00 : f32
      %16 = vector.broadcast %cst_6 : f32 to vector<64x128xf32>
      %17 = arith.maximumf %15, %16 : vector<64x128xf32>
      %c0_7 = arith.constant 0 : index
      %c0_8 = arith.constant 0 : index
      %18 = vector.load %arg7[%c0_7, %c0_8] : memref<128x128xf32, #tpu.memory_space<vmem>>, vector<128x128xf32>
      %cst_9 = arith.constant dense<0.000000e+00> : vector<64x128xf32>
      %19 = tpu.matmul %17, %18, %cst_9 {dimension_numbers = #tpu.dot_dimension_numbers<[1], [0], [0], [1], [0, 0, 1, 1], [], []>} : vector<64x128xf32>, vector<128x128xf32>, vector<64x128xf32> -> vector<64x128xf32>
      %c0_10 = arith.constant 0 : index
      %c0_11 = arith.constant 0 : index
      %20 = vector.load %arg8[%c0_10, %c0_11] : memref<1x128xf32, #tpu.memory_space<vmem>>, vector<1x128xf32>
      %21 = vector.broadcast %20 : vector<1x128xf32> to vector<64x128xf32>
      %22 = arith.addf %19, %21 : vector<64x128xf32>
      %cst_12 = arith.constant 0.000000e+00 : f32
      %23 = vector.broadcast %cst_12 : f32 to vector<64x128xf32>
      %24 = arith.maximumf %22, %23 : vector<64x128xf32>
      %25 = arith.index_cast %1 : i32 to index
      %c0_13 = arith.constant 0 : index
      %26 = vector.load %arg14[%25, %c0_13] : memref<128x128xf32, #tpu.memory_space<vmem>>, vector<64x128xf32>
      tpu.vector_store %arg14[%25, %c0_13], %24 {strides = array<i32>} : memref<128x128xf32, #tpu.memory_space<vmem>>, vector<64x128xf32>,
    } else {
    }
    %c1_i32 = arith.constant 1 : i32
    %8 = arith.cmpi eq, %arg0, %c1_i32 : i32
    %9 = arith.extui %8 : i1 to i32
    %c0_i32_1 = arith.constant 0 : i32
    %10 = arith.cmpi ne, %9, %c0_i32_1 : i32
    scf.if %10 {
      %c0_2 = arith.constant 0 : index
      %c0_3 = arith.constant 0 : index
      %11 = vector.load %arg14[%c0_2, %c0_3] : memref<128x128xf32, #tpu.memory_space<vmem>>, vector<128x128xf32>
      %cst = arith.constant dense<0.000000e+00> : vector<64x128xf32>
      %12 = tpu.matmul %4, %11, %cst {dimension_numbers = #tpu.dot_dimension_numbers<[1], [0], [0], [1], [0, 0, 1, 1], [], []>} : vector<64x128xf32>, vector<128x128xf32>, vector<64x128xf32> -> vector<64x128xf32>
      %c0_4 = arith.constant 0 : index
      %c0_5 = arith.constant 0 : index
      %13 = vector.load %arg9[%c0_4, %c0_5] : memref<128x128xf32, #tpu.memory_space<vmem>>, vector<128x128xf32>
      %cst_6 = arith.constant dense<0.000000e+00> : vector<64x128xf32>
      %14 = tpu.matmul %12, %13, %cst_6 {dimension_numbers = #tpu.dot_dimension_numbers<[1], [0], [0], [1], [0, 0, 1, 1], [], []>} : vector<64x128xf32>, vector<128x128xf32>, vector<64x128xf32> -> vector<64x128xf32>
      %c0_7 = arith.constant 0 : index
      %c0_8 = arith.constant 0 : index
      %15 = vector.load %arg10[%c0_7, %c0_8] : memref<1x128xf32, #tpu.memory_space<vmem>>, vector<1x128xf32>
      %16 = vector.broadcast %15 : vector<1x128xf32> to vector<64x128xf32>
      %17 = arith.addf %14, %16 : vector<64x128xf32>
      %cst_9 = arith.constant 0.000000e+00 : f32
      %18 = vector.broadcast %cst_9 : f32 to vector<64x128xf32>
      %19 = arith.maximumf %17, %18 : vector<64x128xf32>
      %c0_10 = arith.constant 0 : index
      %c0_11 = arith.constant 0 : index
      %20 = vector.load %arg11[%c0_10, %c0_11] : memref<128x128xf32, #tpu.memory_space<vmem>>, vector<128x128xf32>
      %cst_12 = arith.constant dense<0.000000e+00> : vector<64x128xf32>
      %21 = tpu.matmul %19, %20, %cst_12 {dimension_numbers = #tpu.dot_dimension_numbers<[1], [0], [0], [1], [0, 0, 1, 1], [], []>} : vector<64x128xf32>, vector<128x128xf32>, vector<64x128xf32> -> vector<64x128xf32>
      %c0_13 = arith.constant 0 : index
      %c0_14 = arith.constant 0 : index
      %22 = vector.load %arg12[%c0_13, %c0_14] : memref<1x128xf32, #tpu.memory_space<vmem>>, vector<1x128xf32>
      %23 = vector.broadcast %22 : vector<1x128xf32> to vector<64x128xf32>
      %24 = arith.addf %21, %23 : vector<64x128xf32>
      %c16_i32 = arith.constant 16 : i32
      %25 = arith.muli %arg1, %c16_i32 : i32
      %26 = tpu.assume_multiple %25, 16 : i32
      %c0_15 = arith.constant 0 : index
      %c0_16 = arith.constant 0 : index
      %27 = vector.load %arg5[%c0_15, %c0_16] : memref<16x64xf32, #tpu.memory_space<vmem>>, vector<16x64xf32>
      %cst_17 = arith.constant dense<0.000000e+00> : vector<16x128xf32>
      %28 = tpu.matmul %27, %24, %cst_17 {dimension_numbers = #tpu.dot_dimension_numbers<[1], [0], [0], [1], [0, 0, 1, 1], [], []>} : vector<16x64xf32>, vector<64x128xf32>, vector<16x128xf32> -> vector<16x128xf32>
      %29 = arith.index_cast %26 : i32 to index
      %c0_18 = arith.constant 0 : index
      %30 = vector.load %arg15[%29, %c0_18] : memref<32x128xf32, #tpu.memory_space<vmem>>, vector<16x128xf32>
      tpu.vector_store %arg15[%29, %c0_18], %28 {strides = array<i32>} : memref<32x128xf32, #tpu.memory_space<vmem>>, vector<16x128xf32>,
      %c1_i32_19 = arith.constant 1 : i32
      %31 = arith.cmpi eq, %arg1, %c1_i32_19 : i32
      %32 = arith.extui %31 : i1 to i32
      %c0_i32_20 = arith.constant 0 : i32
      %33 = arith.cmpi ne, %32, %c0_i32_20 : i32
      scf.if %33 {
        %c0_21 = arith.constant 0 : index
        %c0_22 = arith.constant 0 : index
        %34 = vector.load %arg4[%c0_21, %c0_22] : memref<8x32xf32, #tpu.memory_space<vmem>>, vector<8x32xf32>
        %cst_23 = arith.constant dense<0.000000e+00> : vector<8xf32>
        %35 = vector.multi_reduction <add>, %34, %cst_23 [1] : vector<8x32xf32> to vector<8xf32>
        %36 = vector.shape_cast %35 : vector<8xf32> to vector<8x1xf32>
        %cst_24 = arith.constant 9.99999974E-5 : f32
        %37 = vector.broadcast %cst_24 : f32 to vector<8x1xf32>
        %38 = arith.addf %36, %37 : vector<8x1xf32>
        %39 = tpu.reciprocal %38 : vector<8x1xf32> -> vector<8x1xf32>
        %40 = vector.broadcast %39 : vector<8x1xf32> to vector<8x32xf32>
        %41 = arith.mulf %34, %40 : vector<8x32xf32>
        %c0_25 = arith.constant 0 : index
        %c0_26 = arith.constant 0 : index
        %42 = vector.load %arg15[%c0_25, %c0_26] : memref<32x128xf32, #tpu.memory_space<vmem>>, vector<32x128xf32>
        %cst_27 = arith.constant dense<0.000000e+00> : vector<8x128xf32>
        %43 = tpu.matmul %41, %42, %cst_27 {dimension_numbers = #tpu.dot_dimension_numbers<[1], [0], [0], [1], [0, 0, 1, 1], [], []>} : vector<8x32xf32>, vector<32x128xf32>, vector<8x128xf32> -> vector<8x128xf32>
        %c0_28 = arith.constant 0 : index
        %c0_29 = arith.constant 0 : index
        %44 = vector.load %arg13[%c0_28, %c0_29] : memref<8x128xf32, #tpu.memory_space<vmem>>, vector<8x128xf32>
        tpu.vector_store %arg13[%c0_28, %c0_29], %43 {strides = array<i32>} : memref<8x128xf32, #tpu.memory_space<vmem>>, vector<8x128xf32>,
      } else {
      }
    } else {
    }
    return
  }
  func.func @transform_0(%arg0: i32, %arg1: i32) -> (i32, i32) {
    %c0_i32 = arith.constant 0 : i32
    %c0_i32_0 = arith.constant 0 : i32
    %c0_i32_1 = arith.constant 0 : i32
    return %c0_i32, %c0_i32_0 : i32, i32
  }
  func.func @transform_1(%arg0: i32, %arg1: i32) -> (i32, i32) {
    %c0_i32 = arith.constant 0 : i32
    %c0_i32_0 = arith.constant 0 : i32
    %c0_i32_1 = arith.constant 0 : i32
    return %c0_i32, %c0_i32_0 : i32, i32
  }
  func.func @transform_2(%arg0: i32, %arg1: i32) -> (i32, i32) {
    %c0_i32 = arith.constant 0 : i32
    %c0_i32_0 = arith.constant 0 : i32
    %c0_i32_1 = arith.constant 0 : i32
    return %c0_i32, %c0_i32_0 : i32, i32
  }
  func.func @transform_3(%arg0: i32, %arg1: i32) -> (i32, i32) {
    %c0_i32 = arith.constant 0 : i32
    %c0_i32_0 = arith.constant 0 : i32
    %c0_i32_1 = arith.constant 0 : i32
    return %c0_i32, %c0_i32_0 : i32, i32
  }
  func.func @transform_4(%arg0: i32, %arg1: i32) -> (i32, i32) {
    %c0_i32 = arith.constant 0 : i32
    %c0_i32_0 = arith.constant 0 : i32
    %c0_i32_1 = arith.constant 0 : i32
    return %c0_i32, %c0_i32_0 : i32, i32
  }
  func.func @transform_5(%arg0: i32, %arg1: i32) -> (i32, i32) {
    %c0_i32 = arith.constant 0 : i32
    %c0_i32_0 = arith.constant 0 : i32
    %c0_i32_1 = arith.constant 0 : i32
    return %c0_i32, %c0_i32_0 : i32, i32
  }
  func.func @transform_6(%arg0: i32, %arg1: i32) -> (i32, i32) {
    %c0_i32 = arith.constant 0 : i32
    %c0_i32_0 = arith.constant 0 : i32
    %c0_i32_1 = arith.constant 0 : i32
    return %c0_i32, %c0_i32_0 : i32, i32
  }
  func.func @transform_7(%arg0: i32, %arg1: i32) -> (i32, i32) {
    %c0_i32 = arith.constant 0 : i32
    %c0_i32_0 = arith.constant 0 : i32
    %c0_i32_1 = arith.constant 0 : i32
    return %c0_i32, %c0_i32_0 : i32, i32
  }
  func.func @transform_8(%arg0: i32, %arg1: i32) -> (i32, i32) {
    %c0_i32 = arith.constant 0 : i32
    %c0_i32_0 = arith.constant 0 : i32
    %c0_i32_1 = arith.constant 0 : i32
    return %c0_i32, %c0_i32_0 : i32, i32
  }
  func.func @transform_9(%arg0: i32, %arg1: i32) -> (i32, i32) {
    %c0_i32 = arith.constant 0 : i32
    %c0_i32_0 = arith.constant 0 : i32
    %c0_i32_1 = arith.constant 0 : i32
    return %c0_i32, %c0_i32_0 : i32, i32
  }
  func.func @transform_10(%arg0: i32, %arg1: i32) -> (i32, i32) {
    %c0_i32 = arith.constant 0 : i32
    %c0_i32_0 = arith.constant 0 : i32
    %c0_i32_1 = arith.constant 0 : i32
    return %c0_i32, %c0_i32_0 : i32, i32
  }
  func.func @transform_11(%arg0: i32, %arg1: i32) -> (i32, i32) {
    %c0_i32 = arith.constant 0 : i32
    %c0_i32_0 = arith.constant 0 : i32
    %c0_i32_1 = arith.constant 0 : i32
    return %c0_i32, %c0_i32_0 : i32, i32
  }
}

</mosaic_0001>

<llo_original>
// kernel: tpu_custom_call.1
$region0: #{tpu_custom_call.1}
  #allocation0 [shape = 'u32[]', space=smem, size = 0x4, offset = 0x4, fixed_abs, tag = 'smem constant byte address 0x4 - core index']
  #allocation1 [shape = 'u32[72,128]{1,0:T(1,128)}', space=vmem, size = 0x9000, scoped, tag = 'internal scratch']
  #allocation2 [shape = 'f32[128,128]{1,0:T(8,128)}', space=vmem, size = 0x10000, scoped, tag = 'scratch operand']
  #allocation3 [shape = 'f32[32,128]{1,0:T(8,128)}', space=vmem, size = 0x4000, scoped, tag = 'scratch operand']
  %s0 = inlined_call_operand.hbm [shape: s8[128,128], index: 0, kind: input, shape index: {}]
  %s1 = inlined_call_operand.hbm [shape: f32[128,128], index: 1, kind: input, shape index: {}]
  %s2 = inlined_call_operand.hbm [shape: f32[8,32], index: 2, kind: input, shape index: {}]
  %s3 = inlined_call_operand.hbm [shape: f32[16,64], index: 3, kind: input, shape index: {}]
  %s4 = inlined_call_operand.vmem [shape: f32[1,128], index: 4, kind: input, shape index: {}]
  %s5 = inlined_call_operand.hbm [shape: f32[128,128], index: 5, kind: input, shape index: {}]
  %s6 = inlined_call_operand.vmem [shape: f32[1,128], index: 6, kind: input, shape index: {}]
  %s7 = inlined_call_operand.hbm [shape: f32[128,128], index: 7, kind: input, shape index: {}]
  %s8 = inlined_call_operand.vmem [shape: f32[1,128], index: 8, kind: input, shape index: {}]
  %s9 = inlined_call_operand.hbm [shape: f32[128,128], index: 9, kind: input, shape index: {}]
  %s10 = inlined_call_operand.vmem [shape: f32[1,128], index: 10, kind: input, shape index: {}]
  %s11 = inlined_call_operand.hbm [shape: f32[8,128], index: 11, kind: output, shape index: {}]
  %s12 = sld [smem:[#allocation0]]
  $region117: #{tpu_custom_call.1} parent=0
    _
  %s14 = ssub.s32 1, %s12
  %s15 = scalar_select 0, %s14, %s12
  $region1: #{tpu_custom_call.1} parent=0
    #allocation4 [shape = 'u8[16384]{0}', space=vmem, size = 0x4000, scoped, tag = 'input window, operand 0, single buffered']
    #allocation5 [shape = 's32[2]{0}', space=sflag, size = 0x8, scoped, tag = 'scoped memory for tpu_custom_call.1']
    #allocation6 [shape = 's32[2]{0}', space=sflag, size = 0x8, scoped, tag = 'scoped memory for tpu_custom_call.1']
    #allocation7 [shape = 'u8[65536]{0}', space=vmem, size = 0x10000, scoped, tag = 'input window, operand 1, single buffered']
    #allocation8 [shape = 's32[1]{0}', space=sflag, size = 0x4, scoped, tag = 'scoped memory for tpu_custom_call.1']
    #allocation9 [shape = 'u8[4096]{0}', space=vmem, size = 0x1000, scoped, tag = 'input window, operand 2, single buffered']
    #allocation10 [shape = 'u8[8192]{0}', space=vmem, size = 0x2000, scoped, tag = 'input window, operand 3, single buffered']
    #allocation11 [shape = 's32[1]{0}', space=sflag, size = 0x4, scoped, tag = 'scoped memory for tpu_custom_call.1']
    #allocation12 [shape = 'u8[65536]{0}', space=vmem, size = 0x10000, scoped, tag = 'input window, operand 5, single buffered']
    #allocation13 [shape = 'u8[65536]{0}', space=vmem, size = 0x10000, scoped, tag = 'input window, operand 7, single buffered']
    #allocation14 [shape = 's32[1]{0}', space=sflag, size = 0x4, scoped, tag = 'scoped memory for tpu_custom_call.1']
    #allocation15 [shape = 'u8[65536]{0}', space=vmem, size = 0x10000, scoped, tag = 'input window, operand 9, single buffered']
    #allocation16 [shape = 'u8[4096]{0}', space=vmem, size = 0x1000, scoped, tag = 'output window, operand 0, single buffered']
    %16 = vsyncpa [#allocation5], 0
    %17 = vsyncpa [#allocation8], 0
    %18 = vsyncpa [#allocation11], 0
    %19 = vsyncpa [#allocation14], 0
    %20 = vsyncpa [#allocation6], 0
    loop: start=0, step=1, limit=6
    $region2: #{tpu_custom_call.1} parent=1 // loop_pre_header
      _
    $region3: #{tpu_custom_call.1} parent=1 // loop_header
      %s22 = sphi 0, %s26
      %p23 = scmp.ge.s32.totalorder %s22, 6
      %s29 = sphi 0, %s41
      %s30 = sphi 0, %s37
      %s31 = sphi 0, %s29
      %s32 = sphi 0, %s30
      %s33 = sphi 0, %s31
      %s34 = sphi 0, %s32
      %s42 = sphi 0, %s42
      %s44 = sphi 0, %s42
      %s45 = sphi 0, %s44
      %s59 = sphi 0, %s45
      %s63 = sphi 0, %s63
      %s65 = sphi 0, %s63
      %s66 = sphi 0, %s65
      %s80 = sphi 0, %s66
      %s84 = sphi 0, %s84
      %s86 = sphi 0, %s84
      %s87 = sphi 0, %s86
      %s101 = sphi 0, %s87
      %s105 = sphi 0, %s105
      %s107 = sphi 0, %s105
      %s108 = sphi 0, %s107
      %s122 = sphi 0, %s108
      %s126 = sphi 0, %s126
      %s128 = sphi 0, %s126
      %s129 = sphi 0, %s128
      %s143 = sphi 0, %s129
      %s147 = sphi 0, %s147
      %s149 = sphi 0, %s147
      %s150 = sphi 0, %s149
      %s164 = sphi 0, %s150
      %s168 = sphi 0, %s168
      %s170 = sphi 0, %s168
      %s171 = sphi 0, %s170
      %s185 = sphi 0, %s171
      %s189 = sphi 0, %s189
      %s191 = sphi 0, %s189
      %s192 = sphi 0, %s191
      %s206 = sphi 0, %s192
      %s210 = sphi 0, %s210
      %s212 = sphi 0, %s210
      %s213 = sphi 0, %s212
      %s227 = sphi 0, %s213
      %s231 = sphi 0, %s231
      %s233 = sphi 0, %s231
      %s234 = sphi 0, %s233
      %s248 = sphi 0, %s234
      %s252 = sphi 0, %s252
      %s254 = sphi 0, %s252
      %s255 = sphi 0, %s254
      %s269 = sphi 0, %s255
      %s273 = sphi 0, %s273
      %s275 = sphi 0, %s273
      %s276 = sphi 0, %s275
      %s290 = sphi 0, %s276
    $region4: #{tpu_custom_call.1} parent=1 // loop_header_branch
      %25 = sbr.rel (%p23) target = $region8
    $region5: #{tpu_custom_call.1} parent=1 // loop_body
      %s27 = ssub.s32 %s22, 1
      %s28 = ssub.s32 %s22, 2
      %s35 = sadd.s32 1, %s30
      %p36 = scmp.ge.s32.totalorder %s35, 2
      %s37 = scalar_select %p36, 0, %s35
      %s38 = sadd.s32 1, %s29
      %s39 = scalar_select %p36, %s38, %s29
      %p40 = scmp.ge.s32.totalorder %s39, 2
      %s41 = scalar_select %p40, 0, %s39
      %s43 = sadd.s32 %s42, 1
      %p46 = scmp.eq.s32.totalorder %s22, 3
      %p47 = scmp.ne.s32.totalorder %s42, %s44
      %p48 = scmp.eq.s32.totalorder %s22, 0
      %p49 = por %p47, %p48
      %p50 = scmp.ne.s32.totalorder %s42, %s44
      %p51 = scmp.eq.s32.totalorder %s27, 3
      %p52 = por %p50, %p51
      %p53 = scmp.ne.s32.totalorder %s44, %s45
      %p54 = scmp.eq.s32.totalorder %s27, 0
      %p55 = por %p53, %p54
      %p56 = scmp.ne.s32.totalorder %s44, %s45
      %p57 = scmp.eq.s32.totalorder %s28, 3
      %p58 = por %p56, %p57
      %p60 = scmp.ne.s32.totalorder %s45, %s59
      %p61 = scmp.eq.s32.totalorder %s28, 0
      %p62 = por %p60, %p61
      %s64 = sadd.s32 %s63, 1
      %p67 = scmp.eq.s32.totalorder %s22, 3
      %p68 = scmp.ne.s32.totalorder %s63, %s65
      %p69 = scmp.eq.s32.totalorder %s22, 0
      %p70 = por %p68, %p69
      %p71 = scmp.ne.s32.totalorder %s63, %s65
      %p72 = scmp.eq.s32.totalorder %s27, 3
      %p73 = por %p71, %p72
      %p74 = scmp.ne.s32.totalorder %s65, %s66
      %p75 = scmp.eq.s32.totalorder %s27, 0
      %p76 = por %p74, %p75
      %p77 = scmp.ne.s32.totalorder %s65, %s66
      %p78 = scmp.eq.s32.totalorder %s28, 3
      %p79 = por %p77, %p78
      %p81 = scmp.ne.s32.totalorder %s66, %s80
      %p82 = scmp.eq.s32.totalorder %s28, 0
      %p83 = por %p81, %p82
      %s85 = sadd.s32 %s84, 1
      %p88 = scmp.eq.s32.totalorder %s22, 3
      %p89 = scmp.ne.s32.totalorder %s84, %s86
      %p90 = scmp.eq.s32.totalorder %s22, 0
      %p91 = por %p89, %p90
      %p92 = scmp.ne.s32.totalorder %s84, %s86
      %p93 = scmp.eq.s32.totalorder %s27, 3
      %p94 = por %p92, %p93
      %p95 = scmp.ne.s32.totalorder %s86, %s87
      %p96 = scmp.eq.s32.totalorder %s27, 0
      %p97 = por %p95, %p96
      %p98 = scmp.ne.s32.totalorder %s86, %s87
      %p99 = scmp.eq.s32.totalorder %s28, 3
      %p100 = por %p98, %p99
      %p102 = scmp.ne.s32.totalorder %s87, %s101
      %p103 = scmp.eq.s32.totalorder %s28, 0
      %p104 = por %p102, %p103
      %s106 = sadd.s32 %s105, 1
      %p109 = scmp.eq.s32.totalorder %s22, 3
      %p110 = scmp.ne.s32.totalorder %s105, %s107
      %p111 = scmp.eq.s32.totalorder %s22, 0
      %p112 = por %p110, %p111
      %p113 = scmp.ne.s32.totalorder %s105, %s107
      %p114 = scmp.eq.s32.totalorder %s27, 3
      %p115 = por %p113, %p114
      %p116 = scmp.ne.s32.totalorder %s107, %s108
      %p117 = scmp.eq.s32.totalorder %s27, 0
      %p118 = por %p116, %p117
      %p119 = scmp.ne.s32.totalorder %s107, %s108
      %p120 = scmp.eq.s32.totalorder %s28, 3
      %p121 = por %p119, %p120
      %p123 = scmp.ne.s32.totalorder %s108, %s122
      %p124 = scmp.eq.s32.totalorder %s28, 0
      %p125 = por %p123, %p124
      %s127 = sadd.s32 %s126, 1
      %p130 = scmp.eq.s32.totalorder %s22, 3
      %p131 = scmp.ne.s32.totalorder %s126, %s128
      %p132 = scmp.eq.s32.totalorder %s22, 0
      %p133 = por %p131, %p132
      %p134 = scmp.ne.s32.totalorder %s126, %s128
      %p135 = scmp.eq.s32.totalorder %s27, 3
      %p136 = por %p134, %p135
      %p137 = scmp.ne.s32.totalorder %s128, %s129
      %p138 = scmp.eq.s32.totalorder %s27, 0
      %p139 = por %p137, %p138
      %p140 = scmp.ne.s32.totalorder %s128, %s129
      %p141 = scmp.eq.s32.totalorder %s28, 3
      %p142 = por %p140, %p141
      %p144 = scmp.ne.s32.totalorder %s129, %s143
      %p145 = scmp.eq.s32.totalorder %s28, 0
      %p146 = por %p144, %p145
      %s148 = sadd.s32 %s147, 1
      %p151 = scmp.eq.s32.totalorder %s22, 3
      %p152 = scmp.ne.s32.totalorder %s147, %s149
      %p153 = scmp.eq.s32.totalorder %s22, 0
      %p154 = por %p152, %p153
      %p155 = scmp.ne.s32.totalorder %s147, %s149
      %p156 = scmp.eq.s32.totalorder %s27, 3
      %p157 = por %p155, %p156
      %p158 = scmp.ne.s32.totalorder %s149, %s150
      %p159 = scmp.eq.s32.totalorder %s27, 0
      %p160 = por %p158, %p159
      %p161 = scmp.ne.s32.totalorder %s149, %s150
      %p162 = scmp.eq.s32.totalorder %s28, 3
      %p163 = por %p161, %p162
      %p165 = scmp.ne.s32.totalorder %s150, %s164
      %p166 = scmp.eq.s32.totalorder %s28, 0
      %p167 = por %p165, %p166
      %s169 = sadd.s32 %s168, 1
      %p172 = scmp.eq.s32.totalorder %s22, 3
      %p173 = scmp.ne.s32.totalorder %s168, %s170
      %p174 = scmp.eq.s32.totalorder %s22, 0
      %p175 = por %p173, %p174
      %p176 = scmp.ne.s32.totalorder %s168, %s170
      %p177 = scmp.eq.s32.totalorder %s27, 3
      %p178 = por %p176, %p177
      %p179 = scmp.ne.s32.totalorder %s170, %s171
      %p180 = scmp.eq.s32.totalorder %s27, 0
      %p181 = por %p179, %p180
      %p182 = scmp.ne.s32.totalorder %s170, %s171
      %p183 = scmp.eq.s32.totalorder %s28, 3
      %p184 = por %p182, %p183
      %p186 = scmp.ne.s32.totalorder %s171, %s185
      %p187 = scmp.eq.s32.totalorder %s28, 0
      %p188 = por %p186, %p187
      %s190 = sadd.s32 %s189, 1
      %p193 = scmp.eq.s32.totalorder %s22, 3
      %p194 = scmp.ne.s32.totalorder %s189, %s191
      %p195 = scmp.eq.s32.totalorder %s22, 0
      %p196 = por %p194, %p195
      %p197 = scmp.ne.s32.totalorder %s189, %s191
      %p198 = scmp.eq.s32.totalorder %s27, 3
      %p199 = por %p197, %p198
      %p200 = scmp.ne.s32.totalorder %s191, %s192
      %p201 = scmp.eq.s32.totalorder %s27, 0
      %p202 = por %p200, %p201
      %p203 = scmp.ne.s32.totalorder %s191, %s192
      %p204 = scmp.eq.s32.totalorder %s28, 3
      %p205 = por %p203, %p204
      %p207 = scmp.ne.s32.totalorder %s192, %s206
      %p208 = scmp.eq.s32.totalorder %s28, 0
      %p209 = por %p207, %p208
      %s211 = sadd.s32 %s210, 1
      %p214 = scmp.eq.s32.totalorder %s22, 3
      %p215 = scmp.ne.s32.totalorder %s210, %s212
      %p216 = scmp.eq.s32.totalorder %s22, 0
      %p217 = por %p215, %p216
      %p218 = scmp.ne.s32.totalorder %s210, %s212
      %p219 = scmp.eq.s32.totalorder %s27, 3
      %p220 = por %p218, %p219
      %p221 = scmp.ne.s32.totalorder %s212, %s213
      %p222 = scmp.eq.s32.totalorder %s27, 0
      %p223 = por %p221, %p222
      %p224 = scmp.ne.s32.totalorder %s212, %s213
      %p225 = scmp.eq.s32.totalorder %s28, 3
      %p226 = por %p224, %p225
      %p228 = scmp.ne.s32.totalorder %s213, %s227
      %p229 = scmp.eq.s32.totalorder %s28, 0
      %p230 = por %p228, %p229
      %s232 = sadd.s32 %s231, 1
      %p235 = scmp.eq.s32.totalorder %s22, 3
      %p236 = scmp.ne.s32.totalorder %s231, %s233
      %p237 = scmp.eq.s32.totalorder %s22, 0
      %p238 = por %p236, %p237
      %p239 = scmp.ne.s32.totalorder %s231, %s233
      %p240 = scmp.eq.s32.totalorder %s27, 3
      %p241 = por %p239, %p240
      %p242 = scmp.ne.s32.totalorder %s233, %s234
      %p243 = scmp.eq.s32.totalorder %s27, 0
      %p244 = por %p242, %p243
      %p245 = scmp.ne.s32.totalorder %s233, %s234
      %p246 = scmp.eq.s32.totalorder %s28, 3
      %p247 = por %p245, %p246
      %p249 = scmp.ne.s32.totalorder %s234, %s248
      %p250 = scmp.eq.s32.totalorder %s28, 0
      %p251 = por %p249, %p250
      %s253 = sadd.s32 %s252, 1
      %p256 = scmp.eq.s32.totalorder %s22, 3
      %p257 = scmp.ne.s32.totalorder %s252, %s254
      %p258 = scmp.eq.s32.totalorder %s22, 0
      %p259 = por %p257, %p258
      %p260 = scmp.ne.s32.totalorder %s252, %s254
      %p261 = scmp.eq.s32.totalorder %s27, 3
      %p262 = por %p260, %p261
      %p263 = scmp.ne.s32.totalorder %s254, %s255
      %p264 = scmp.eq.s32.totalorder %s27, 0
      %p265 = por %p263, %p264
      %p266 = scmp.ne.s32.totalorder %s254, %s255
      %p267 = scmp.eq.s32.totalorder %s28, 3
      %p268 = por %p266, %p267
      %p270 = scmp.ne.s32.totalorder %s255, %s269
      %p271 = scmp.eq.s32.totalorder %s28, 0
      %p272 = por %p270, %p271
      %s274 = sadd.s32 %s273, 1
      %p277 = scmp.eq.s32.totalorder %s22, 3
      %p278 = scmp.ne.s32.totalorder %s273, %s275
      %p279 = scmp.eq.s32.totalorder %s22, 0
      %p280 = por %p278, %p279
      %p281 = scmp.ne.s32.totalorder %s273, %s275
      %p282 = scmp.eq.s32.totalorder %s27, 3
      %p283 = por %p281, %p282
      %p284 = scmp.ne.s32.totalorder %s275, %s276
      %p285 = scmp.eq.s32.totalorder %s27, 0
      %p286 = por %p284, %p285
      %p287 = scmp.ne.s32.totalorder %s275, %s276
      %p288 = scmp.eq.s32.totalorder %s28, 3
      %p289 = por %p287, %p288
      %p291 = scmp.ne.s32.totalorder %s276, %s290
      %p292 = scmp.eq.s32.totalorder %s28, 0
      %p293 = por %p291, %p292
      %p294 = scmp.le.s32.totalorder 1, %s22
      %p295 = scmp.lt.s32.totalorder %s22, 5
      %p296 = pnand %p294, %p295
      %p297 = pneg %p296
      // Predicated region
      $region9: #{tpu_custom_call.1} parent=5 // pred_check
        _
      $region10: #{tpu_custom_call.1} parent=5 // pred_check_branch
        %299 = sbr.rel (%p296) target = $region12
      $region11: #{tpu_custom_call.1} parent=5 // pred_region
        %s300 = ssub.s32 %s22, 1
        // Predicated region
        $region13: #{tpu_custom_call.1} parent=11 // pred_check
          %p301 = pneg %p55
        $region14: #{tpu_custom_call.1} parent=11 // pred_check_branch
          %303 = sbr.rel (%p301) target = $region16
        $region15: #{tpu_custom_call.1} parent=11 // pred_region
          %305 = vsyncadd [#allocation5], 0
          %s306 = sshll.u32 %s0, 4
          %s307 = int_to_ptr.hbm [resolvable:$true] %s306
          %s308 = sshll.u32 [#allocation4], 4
          %s309 = int_to_ptr.vmem [resolvable:$true] %s308
          %314 = dma.hbm_to_vmem [thread:$0]  %s307, 512, %s309, [#allocation5], 128, 128, 8
        $region16: #{tpu_custom_call.1} parent=11 // pred_fallthru
          _
        // Predicated region
        $region17: #{tpu_custom_call.1} parent=11 // pred_check
          %p315 = pneg %p76
        $region18: #{tpu_custom_call.1} parent=11 // pred_check_branch
          %317 = sbr.rel (%p315) target = $region20
        $region19: #{tpu_custom_call.1} parent=11 // pred_region
          %319 = vsyncadd [#allocation8], 0
          %s320 = sshll.u32 %s1, 4
          %s321 = int_to_ptr.hbm [resolvable:$true] %s320
          %s322 = sshll.u32 [#allocation7], 4
          %s323 = int_to_ptr.vmem [resolvable:$true] %s322
          %328 = dma.hbm_to_vmem [thread:$0]  %s321, 2048, %s323, [#allocation8], 128, 128, 8
        $region20: #{tpu_custom_call.1} parent=11 // pred_fallthru
          _
        // Predicated region
        $region21: #{tpu_custom_call.1} parent=11 // pred_check
          %p329 = pneg %p97
        $region22: #{tpu_custom_call.1} parent=11 // pred_check_branch
          %331 = sbr.rel (%p329) target = $region24
        $region23: #{tpu_custom_call.1} parent=11 // pred_region
          %333 = vsyncadd [#allocation8], 0
          %s335 = sshll.u32 %s2, 4
          %s336 = int_to_ptr.hbm [resolvable:$true] %s335
          %s337 = sshll.u32 [#allocation9], 4
          %s338 = int_to_ptr.vmem [resolvable:$true] %s337
          %340 = dma.hbm_to_vmem [thread:$0]  %s336, 128, %s338, [#allocation8]
        $region24: #{tpu_custom_call.1} parent=11 // pred_fallthru
          _
        // Predicated region
        $region25: #{tpu_custom_call.1} parent=11 // pred_check
          %p341 = pneg %p118
        $region26: #{tpu_custom_call.1} parent=11 // pred_check_branch
          %343 = sbr.rel (%p341) target = $region28
        $region27: #{tpu_custom_call.1} parent=11 // pred_region
          %345 = vsyncadd [#allocation11], 0
          %s346 = sshll.u32 %s3, 4
          %s347 = int_to_ptr.hbm [resolvable:$true] %s346
          %s348 = sshll.u32 [#allocation10], 4
          %s349 = int_to_ptr.vmem [resolvable:$true] %s348
          %354 = dma.hbm_to_vmem [thread:$0]  %s347, 256, %s349, [#allocation11], 128, 128, 8
        $region28: #{tpu_custom_call.1} parent=11 // pred_fallthru
          _
        // Predicated region
        $region29: #{tpu_custom_call.1} parent=11 // pred_check
          %p355 = pneg %p139
        $region30: #{tpu_custom_call.1} parent=11 // pred_check_branch
          %357 = sbr.rel (%p355) target = $region32
        $region31: #{tpu_custom_call.1} parent=11 // pred_region
          _
        $region32: #{tpu_custom_call.1} parent=11 // pred_fallthru
          _
        // Predicated region
        $region33: #{tpu_custom_call.1} parent=11 // pred_check
          %p358 = pneg %p160
        $region34: #{tpu_custom_call.1} parent=11 // pred_check_branch
          %360 = sbr.rel (%p358) target = $region36
        $region35: #{tpu_custom_call.1} parent=11 // pred_region
          %362 = vsyncadd [#allocation11], 0
          %s363 = sshll.u32 %s5, 4
          %s364 = int_to_ptr.hbm [resolvable:$true] %s363
          %s365 = sshll.u32 [#allocation12], 4
          %s366 = int_to_ptr.vmem [resolvable:$true] %s365
          %371 = dma.hbm_to_vmem [thread:$0]  %s364, 2048, %s366, [#allocation11], 128, 128, 8
        $region36: #{tpu_custom_call.1} parent=11 // pred_fallthru
          _
        // Predicated region
        $region37: #{tpu_custom_call.1} parent=11 // pred_check
          %p372 = pneg %p181
        $region38: #{tpu_custom_call.1} parent=11 // pred_check_branch
          %374 = sbr.rel (%p372) target = $region40
        $region39: #{tpu_custom_call.1} parent=11 // pred_region
          _
        $region40: #{tpu_custom_call.1} parent=11 // pred_fallthru
          _
        // Predicated region
        $region41: #{tpu_custom_call.1} parent=11 // pred_check
          %p375 = pneg %p202
        $region42: #{tpu_custom_call.1} parent=11 // pred_check_branch
          %377 = sbr.rel (%p375) target = $region44
        $region43: #{tpu_custom_call.1} parent=11 // pred_region
          %379 = vsyncadd [#allocation14], 0
          %s380 = sshll.u32 %s7, 4
          %s381 = int_to_ptr.hbm [resolvable:$true] %s380
          %s382 = sshll.u32 [#allocation13], 4
          %s383 = int_to_ptr.vmem [resolvable:$true] %s382
          %388 = dma.hbm_to_vmem [thread:$0]  %s381, 2048, %s383, [#allocation14], 128, 128, 8
        $region44: #{tpu_custom_call.1} parent=11 // pred_fallthru
          _
        // Predicated region
        $region45: #{tpu_custom_call.1} parent=11 // pred_check
          %p389 = pneg %p223
        $region46: #{tpu_custom_call.1} parent=11 // pred_check_branch
          %391 = sbr.rel (%p389) target = $region48
        $region47: #{tpu_custom_call.1} parent=11 // pred_region
          _
        $region48: #{tpu_custom_call.1} parent=11 // pred_fallthru
          _
        // Predicated region
        $region49: #{tpu_custom_call.1} parent=11 // pred_check
          %p392 = pneg %p244
        $region50: #{tpu_custom_call.1} parent=11 // pred_check_branch
          %394 = sbr.rel (%p392) target = $region52
        $region51: #{tpu_custom_call.1} parent=11 // pred_region
          %396 = vsyncadd [#allocation14], 0
          %s397 = sshll.u32 %s9, 4
          %s398 = int_to_ptr.hbm [resolvable:$true] %s397
          %s399 = sshll.u32 [#allocation15], 4
          %s400 = int_to_ptr.vmem [resolvable:$true] %s399
          %405 = dma.hbm_to_vmem [thread:$0]  %s398, 2048, %s400, [#allocation14], 128, 128, 8
        $region52: #{tpu_custom_call.1} parent=11 // pred_fallthru
          _
        // Predicated region
        $region53: #{tpu_custom_call.1} parent=11 // pred_check
          %p406 = pneg %p265
        $region54: #{tpu_custom_call.1} parent=11 // pred_check_branch
          %408 = sbr.rel (%p406) target = $region56
        $region55: #{tpu_custom_call.1} parent=11 // pred_region
          _
        $region56: #{tpu_custom_call.1} parent=11 // pred_fallthru
          _
      $region12: #{tpu_custom_call.1} parent=5 // pred_fallthru
        _
      %p409 = scmp.lt.s32.totalorder %s22, 4
      // Predicated region
      $region57: #{tpu_custom_call.1} parent=5 // pred_check
        %p410 = pneg %p409
      $region58: #{tpu_custom_call.1} parent=5 // pred_check_branch
        %412 = sbr.rel (%p410) target = $region60
      $region59: #{tpu_custom_call.1} parent=5 // pred_region
        _
      $region60: #{tpu_custom_call.1} parent=5 // pred_fallthru
        _
      %p413 = scmp.le.s32.totalorder 1, %s22
      %p414 = scmp.lt.s32.totalorder %s22, 5
      %p415 = pnand %p413, %p414
      %p416 = pneg %p415
      // Predicated region
      $region61: #{tpu_custom_call.1} parent=5 // pred_check
        _
      $region62: #{tpu_custom_call.1} parent=5 // pred_check_branch
        %418 = sbr.rel (%p415) target = $region64
      $region63: #{tpu_custom_call.1} parent=5 // pred_region
        %s419 = ssub.s32 %s22, 1
        // Predicated region
        $region65: #{tpu_custom_call.1} parent=63 // pred_check
          %p420 = pneg %p55
        $region66: #{tpu_custom_call.1} parent=63 // pred_check_branch
          %422 = sbr.rel (%p420) target = $region68
        $region67: #{tpu_custom_call.1} parent=63 // pred_region
          %424 = dma.done [#allocation5], 512
        $region68: #{tpu_custom_call.1} parent=63 // pred_fallthru
          _
        // Predicated region
        $region69: #{tpu_custom_call.1} parent=63 // pred_check
          %p425 = pneg %p76
        $region70: #{tpu_custom_call.1} parent=63 // pred_check_branch
          %427 = sbr.rel (%p425) target = $region72
        $region71: #{tpu_custom_call.1} parent=63 // pred_region
          %429 = dma.done [#allocation8], 2048
        $region72: #{tpu_custom_call.1} parent=63 // pred_fallthru
          _
        // Predicated region
        $region73: #{tpu_custom_call.1} parent=63 // pred_check
          %p430 = pneg %p97
        $region74: #{tpu_custom_call.1} parent=63 // pred_check_branch
          %432 = sbr.rel (%p430) target = $region76
        $region75: #{tpu_custom_call.1} parent=63 // pred_region
          %434 = dma.done [#allocation8], 128
        $region76: #{tpu_custom_call.1} parent=63 // pred_fallthru
          _
        // Predicated region
        $region77: #{tpu_custom_call.1} parent=63 // pred_check
          %p435 = pneg %p118
        $region78: #{tpu_custom_call.1} parent=63 // pred_check_branch
          %437 = sbr.rel (%p435) target = $region80
        $region79: #{tpu_custom_call.1} parent=63 // pred_region
          %439 = dma.done [#allocation11], 256
        $region80: #{tpu_custom_call.1} parent=63 // pred_fallthru
          _
        // Predicated region
        $region81: #{tpu_custom_call.1} parent=63 // pred_check
          %p440 = pneg %p160
        $region82: #{tpu_custom_call.1} parent=63 // pred_check_branch
          %442 = sbr.rel (%p440) target = $region84
        $region83: #{tpu_custom_call.1} parent=63 // pred_region
          %444 = dma.done [#allocation11], 2048
        $region84: #{tpu_custom_call.1} parent=63 // pred_fallthru
          _
        // Predicated region
        $region85: #{tpu_custom_call.1} parent=63 // pred_check
          %p445 = pneg %p202
        $region86: #{tpu_custom_call.1} parent=63 // pred_check_branch
          %447 = sbr.rel (%p445) target = $region88
        $region87: #{tpu_custom_call.1} parent=63 // pred_region
          %449 = dma.done [#allocation14], 2048
        $region88: #{tpu_custom_call.1} parent=63 // pred_fallthru
          _
        // Predicated region
        $region89: #{tpu_custom_call.1} parent=63 // pred_check
          %p450 = pneg %p244
        $region90: #{tpu_custom_call.1} parent=63 // pred_check_branch
          %452 = sbr.rel (%p450) target = $region92
        $region91: #{tpu_custom_call.1} parent=63 // pred_region
          %454 = dma.done [#allocation14], 2048
        $region92: #{tpu_custom_call.1} parent=63 // pred_fallthru
          _
        %p455 = pneg %p55
        %p456 = pneg %p52
        %p457 = pneg %p76
        %p458 = pneg %p73
        %p459 = pneg %p97
        %p460 = pneg %p94
        %p461 = pneg %p118
        %p462 = pneg %p115
        %p463 = pneg %p139
        %p464 = pneg %p136
        %p465 = pneg %p160
        %p466 = pneg %p157
        %p467 = pneg %p181
        %p468 = pneg %p178
        %p469 = pneg %p202
        %p470 = pneg %p199
        %p471 = pneg %p223
        %p472 = pneg %p220
        %p473 = pneg %p244
        %p474 = pneg %p241
        %p475 = pneg %p265
        %p476 = pneg %p262
        %p477 = pneg %p286
        %p478 = pneg %p283
        %s479 = smul.u32 %s32, 64
        %s480 = sshra.s32 %s479, 5
        %s481 = sand.u32 %s479, 31
        %s482 = smul.addr %s480, 8
        %s483 = scalar_lea.vmem [#allocation4], %s482
        %v484 = vld [vmem:[%s483] sm:$0xff]
        %v485 = vld [vmem:[%s483 + $0x8] sm:$0xff]
        %v486 = vunpack.c.0.s8 %v484
        %v487 = vunpack.c.1.s8 %v484
        %v488 = vunpack.c.2.s8 %v484
        %v489 = vunpack.c.3.s8 %v484
        %v490 = vunpack.c.0.s8 %v485
        %v491 = vunpack.c.1.s8 %v485
        %v492 = vunpack.c.2.s8 %v485
        %v493 = vunpack.c.3.s8 %v485
        %v494 = vcvt.s32.f32 %v486
        %v495 = vcvt.s32.f32 %v487
        %v496 = vcvt.s32.f32 %v488
        %v497 = vcvt.s32.f32 %v489
        %v498 = vcvt.s32.f32 %v490
        %v499 = vcvt.s32.f32 %v491
        %v500 = vcvt.s32.f32 %v492
        %v501 = vcvt.s32.f32 %v493
        %p502 = scmp.eq.s32.totalorder %s31, 0
        // Predicated region
        $region93: #{tpu_custom_call.1} parent=63 // pred_check
          %p503 = pneg %p502
        $region94: #{tpu_custom_call.1} parent=63 // pred_check_branch
          %505 = sbr.rel (%p503) target = $region96
        $region95: #{tpu_custom_call.1} parent=63 // pred_region
          %v506 = vld [vmem:[#allocation7] sm:$0xff]
          %v507 = vld [vmem:[#allocation7 + $0x8] sm:$0xff]
          %v508 = vld [vmem:[#allocation7 + $0x10] sm:$0xff]
          %v509 = vld [vmem:[#allocation7 + $0x18] sm:$0xff]
          %v510 = vld [vmem:[#allocation7 + $0x20] sm:$0xff]
          %v511 = vld [vmem:[#allocation7 + $0x28] sm:$0xff]
          %v512 = vld [vmem:[#allocation7 + $0x30] sm:$0xff]
          %v513 = vld [vmem:[#allocation7 + $0x38] sm:$0xff]
          %v514 = vld [vmem:[#allocation7 + $0x40] sm:$0xff]
          %v515 = vld [vmem:[#allocation7 + $0x48] sm:$0xff]
          %v516 = vld [vmem:[#allocation7 + $0x50] sm:$0xff]
          %v517 = vld [vmem:[#allocation7 + $0x58] sm:$0xff]
          %v518 = vld [vmem:[#allocation7 + $0x60] sm:$0xff]
          %v519 = vld [vmem:[#allocation7 + $0x68] sm:$0xff]
          %v520 = vld [vmem:[#allocation7 + $0x70] sm:$0xff]
          %v521 = vld [vmem:[#allocation7 + $0x78] sm:$0xff]
          %v522 = vld [vmem:[%s4] sm:$0x1]
          %v524 = vperm.slane %v522, 0
          %526 = vmatpush.msra.mxu0 %v521
          %527 = vmatpush.msra.mxu0 %v520
          %528 = vmatpush.msra.mxu0 %v519
          %529 = vmatpush.msra.mxu0 %v518
          %530 = vmatpush.msra.mxu0 %v517
          %531 = vmatpush.msra.mxu0 %v516
          %532 = vmatpush.msra.mxu0 %v515
          %533 = vmatpush.msra.mxu0 %v514
          %534 = vmatpush.msra.mxu0 %v513
          %535 = vmatpush.msra.mxu0 %v512
          %536 = vmatpush.msra.mxu0 %v511
          %537 = vmatpush.msra.mxu0 %v510
          %538 = vmatpush.msra.mxu0 %v509
          %539 = vmatpush.msra.mxu0 %v508
          %540 = vmatpush.msra.mxu0 %v507
          %541 = vmatpush.msra.mxu0 %v506
          %542 = vmatmul.f32.gmra.mxu0 %v494
          %v543 = vpop.f32.mrf.mxu0
          %v544 = vadd.f32 %v524, %v543
          %545 = vmatmul.f32.gmra.mxu0 %v495
          %v546 = vpop.f32.mrf.mxu0
          %v547 = vadd.f32 %v524, %v546
          %548 = vmatmul.f32.gmra.mxu0 %v496
          %v549 = vpop.f32.mrf.mxu0
          %v550 = vadd.f32 %v524, %v549
          %551 = vmatmul.f32.gmra.mxu0 %v497
          %v552 = vpop.f32.mrf.mxu0
          %v553 = vadd.f32 %v524, %v552
          %554 = vmatmul.f32.gmra.mxu0 %v498
          %v555 = vpop.f32.mrf.mxu0
          %v556 = vadd.f32 %v524, %v555
          %557 = vmatmul.f32.gmra.mxu0 %v499
          %v558 = vpop.f32.mrf.mxu0
          %v559 = vadd.f32 %v524, %v558
          %560 = vmatmul.f32.gmra.mxu0 %v500
          %v561 = vpop.f32.mrf.mxu0
          %v562 = vadd.f32 %v524, %v561
          %563 = vmatmul.f32.gmra.mxu0 %v501
          %v564 = vpop.f32.mrf.mxu0
          %v565 = vadd.f32 %v524, %v564
          %566 = vdwg.mxu0
          %v567 = vmax.f32 %v544, 0.0
          %v568 = vmax.f32 %v547, 0.0
          %v569 = vmax.f32 %v550, 0.0
          %v570 = vmax.f32 %v553, 0.0
          %v571 = vmax.f32 %v556, 0.0
          %v572 = vmax.f32 %v559, 0.0
          %v573 = vmax.f32 %v562, 0.0
          %v574 = vmax.f32 %v565, 0.0
          %v575 = vld [vmem:[#allocation12] sm:$0xff]
          %v576 = vld [vmem:[#allocation12 + $0x8] sm:$0xff]
          %v577 = vld [vmem:[#allocation12 + $0x10] sm:$0xff]
          %v578 = vld [vmem:[#allocation12 + $0x18] sm:$0xff]
          %v579 = vld [vmem:[#allocation12 + $0x20] sm:$0xff]
          %v580 = vld [vmem:[#allocation12 + $0x28] sm:$0xff]
          %v581 = vld [vmem:[#allocation12 + $0x30] sm:$0xff]
          %v582 = vld [vmem:[#allocation12 + $0x38] sm:$0xff]
          %v583 = vld [vmem:[#allocation12 + $0x40] sm:$0xff]
          %v584 = vld [vmem:[#allocation12 + $0x48] sm:$0xff]
          %v585 = vld [vmem:[#allocation12 + $0x50] sm:$0xff]
          %v586 = vld [vmem:[#allocation12 + $0x58] sm:$0xff]
          %v587 = vld [vmem:[#allocation12 + $0x60] sm:$0xff]
          %v588 = vld [vmem:[#allocation12 + $0x68] sm:$0xff]
          %v589 = vld [vmem:[#allocation12 + $0x70] sm:$0xff]
          %v590 = vld [vmem:[#allocation12 + $0x78] sm:$0xff]
          %v591 = vld [vmem:[%s6] sm:$0x1]
          %v593 = vperm.slane %v591, 0
          %595 = vmatpush.msra.mxu0 %v590
          %596 = vmatpush.msra.mxu0 %v589
          %597 = vmatpush.msra.mxu0 %v588
          %598 = vmatpush.msra.mxu0 %v587
          %599 = vmatpush.msra.mxu0 %v586
          %600 = vmatpush.msra.mxu0 %v585
          %601 = vmatpush.msra.mxu0 %v584
          %602 = vmatpush.msra.mxu0 %v583
          %603 = vmatpush.msra.mxu0 %v582
          %604 = vmatpush.msra.mxu0 %v581
          %605 = vmatpush.msra.mxu0 %v580
          %606 = vmatpush.msra.mxu0 %v579
          %607 = vmatpush.msra.mxu0 %v578
          %608 = vmatpush.msra.mxu0 %v577
          %609 = vmatpush.msra.mxu0 %v576
          %610 = vmatpush.msra.mxu0 %v575
          %611 = vmatmul.f32.gmra.mxu0 %v567
          %v612 = vpop.f32.mrf.mxu0
          %v613 = vadd.f32 %v593, %v612
          %614 = vmatmul.f32.gmra.mxu0 %v568
          %v615 = vpop.f32.mrf.mxu0
          %v616 = vadd.f32 %v593, %v615
          %617 = vmatmul.f32.gmra.mxu0 %v569
          %v618 = vpop.f32.mrf.mxu0
          %v619 = vadd.f32 %v593, %v618
          %620 = vmatmul.f32.gmra.mxu0 %v570
          %v621 = vpop.f32.mrf.mxu0
          %v622 = vadd.f32 %v593, %v621
          %623 = vmatmul.f32.gmra.mxu0 %v571
          %v624 = vpop.f32.mrf.mxu0
          %v625 = vadd.f32 %v593, %v624
          %626 = vmatmul.f32.gmra.mxu0 %v572
          %v627 = vpop.f32.mrf.mxu0
          %v628 = vadd.f32 %v593, %v627
          %629 = vmatmul.f32.gmra.mxu0 %v573
          %v630 = vpop.f32.mrf.mxu0
          %v631 = vadd.f32 %v593, %v630
          %632 = vmatmul.f32.gmra.mxu0 %v574
          %v633 = vpop.f32.mrf.mxu0
          %v634 = vadd.f32 %v593, %v633
          %635 = vdwg.mxu0
          %v636 = vmax.f32 %v613, 0.0
          %v637 = vmax.f32 %v616, 0.0
          %v638 = vmax.f32 %v619, 0.0
          %v639 = vmax.f32 %v622, 0.0
          %v640 = vmax.f32 %v625, 0.0
          %v641 = vmax.f32 %v628, 0.0
          %v642 = vmax.f32 %v631, 0.0
          %v643 = vmax.f32 %v634, 0.0
          %s644 = scalar_lea.vmem [#allocation2], %s479
          %645 = vst [vmem:[%s644] sm:$0xff] %v636
          %646 = vst [vmem:[%s644 + $0x8] sm:$0xff] %v637
          %647 = vst [vmem:[%s644 + $0x10] sm:$0xff] %v638
          %648 = vst [vmem:[%s644 + $0x18] sm:$0xff] %v639
          %649 = vst [vmem:[%s644 + $0x20] sm:$0xff] %v640
          %650 = vst [vmem:[%s644 + $0x28] sm:$0xff] %v641
          %651 = vst [vmem:[%s644 + $0x30] sm:$0xff] %v642
          %652 = vst [vmem:[%s644 + $0x38] sm:$0xff] %v643
        $region96: #{tpu_custom_call.1} parent=63 // pred_fallthru
          _
        %p653 = scmp.eq.s32.totalorder %s31, 1
        // Predicated region
        $region97: #{tpu_custom_call.1} parent=63 // pred_check
          %p654 = pneg %p653
        $region98: #{tpu_custom_call.1} parent=63 // pred_check_branch
          %656 = sbr.rel (%p654) target = $region100
        $region99: #{tpu_custom_call.1} parent=63 // pred_region
          %v657 = vld [vmem:[#allocation2] sm:$0xff]
          %v658 = vld [vmem:[#allocation2 + $0x8] sm:$0xff]
          %v659 = vld [vmem:[#allocation2 + $0x10] sm:$0xff]
          %v660 = vld [vmem:[#allocation2 + $0x18] sm:$0xff]
          %v661 = vld [vmem:[#allocation2 + $0x20] sm:$0xff]
          %v662 = vld [vmem:[#allocation2 + $0x28] sm:$0xff]
          %v663 = vld [vmem:[#allocation2 + $0x30] sm:$0xff]
          %v664 = vld [vmem:[#allocation2 + $0x38] sm:$0xff]
          %v665 = vld [vmem:[#allocation2 + $0x40] sm:$0xff]
          %v666 = vld [vmem:[#allocation2 + $0x48] sm:$0xff]
          %v667 = vld [vmem:[#allocation2 + $0x50] sm:$0xff]
          %v668 = vld [vmem:[#allocation2 + $0x58] sm:$0xff]
          %v669 = vld [vmem:[#allocation2 + $0x60] sm:$0xff]
          %v670 = vld [vmem:[#allocation2 + $0x68] sm:$0xff]
          %v671 = vld [vmem:[#allocation2 + $0x70] sm:$0xff]
          %v672 = vld [vmem:[#allocation2 + $0x78] sm:$0xff]
          %673 = vmatpush.msra.mxu0 %v672
          %674 = vmatpush.msra.mxu0 %v671
          %675 = vmatpush.msra.mxu0 %v670
          %676 = vmatpush.msra.mxu0 %v669
          %677 = vmatpush.msra.mxu0 %v668
          %678 = vmatpush.msra.mxu0 %v667
          %679 = vmatpush.msra.mxu0 %v666
          %680 = vmatpush.msra.mxu0 %v665
          %681 = vmatpush.msra.mxu0 %v664
          %682 = vmatpush.msra.mxu0 %v663
          %683 = vmatpush.msra.mxu0 %v662
          %684 = vmatpush.msra.mxu0 %v661
          %685 = vmatpush.msra.mxu0 %v660
          %686 = vmatpush.msra.mxu0 %v659
          %687 = vmatpush.msra.mxu0 %v658
          %688 = vmatpush.msra.mxu0 %v657
          %689 = vmatmul.f32.gmra.mxu0 %v494
          %v690 = vpop.f32.mrf.mxu0
          %v691 = vadd.f32 0.0, %v690
          %692 = vmatmul.f32.gmra.mxu0 %v495
          %v693 = vpop.f32.mrf.mxu0
          %v694 = vadd.f32 0.0, %v693
          %695 = vmatmul.f32.gmra.mxu0 %v496
          %v696 = vpop.f32.mrf.mxu0
          %v697 = vadd.f32 0.0, %v696
          %698 = vmatmul.f32.gmra.mxu0 %v497
          %v699 = vpop.f32.mrf.mxu0
          %v700 = vadd.f32 0.0, %v699
          %701 = vmatmul.f32.gmra.mxu0 %v498
          %v702 = vpop.f32.mrf.mxu0
          %v703 = vadd.f32 0.0, %v702
          %704 = vmatmul.f32.gmra.mxu0 %v499
          %v705 = vpop.f32.mrf.mxu0
          %v706 = vadd.f32 0.0, %v705
          %707 = vmatmul.f32.gmra.mxu0 %v500
          %v708 = vpop.f32.mrf.mxu0
          %v709 = vadd.f32 0.0, %v708
          %710 = vmatmul.f32.gmra.mxu0 %v501
          %v711 = vpop.f32.mrf.mxu0
          %v712 = vadd.f32 0.0, %v711
          %713 = vdwg.mxu0
          %v714 = vld [vmem:[#allocation13] sm:$0xff]
          %v715 = vld [vmem:[#allocation13 + $0x8] sm:$0xff]
          %v716 = vld [vmem:[#allocation13 + $0x10] sm:$0xff]
          %v717 = vld [vmem:[#allocation13 + $0x18] sm:$0xff]
          %v718 = vld [vmem:[#allocation13 + $0x20] sm:$0xff]
          %v719 = vld [vmem:[#allocation13 + $0x28] sm:$0xff]
          %v720 = vld [vmem:[#allocation13 + $0x30] sm:$0xff]
          %v721 = vld [vmem:[#allocation13 + $0x38] sm:$0xff]
          %v722 = vld [vmem:[#allocation13 + $0x40] sm:$0xff]
          %v723 = vld [vmem:[#allocation13 + $0x48] sm:$0xff]
          %v724 = vld [vmem:[#allocation13 + $0x50] sm:$0xff]
          %v725 = vld [vmem:[#allocation13 + $0x58] sm:$0xff]
          %v726 = vld [vmem:[#allocation13 + $0x60] sm:$0xff]
          %v727 = vld [vmem:[#allocation13 + $0x68] sm:$0xff]
          %v728 = vld [vmem:[#allocation13 + $0x70] sm:$0xff]
          %v729 = vld [vmem:[#allocation13 + $0x78] sm:$0xff]
          %v730 = vld [vmem:[%s8] sm:$0x1]
          %v732 = vperm.slane %v730, 0
          %734 = vmatpush.msra.mxu0 %v729
          %735 = vmatpush.msra.mxu0 %v728
          %736 = vmatpush.msra.mxu0 %v727
          %737 = vmatpush.msra.mxu0 %v726
          %738 = vmatpush.msra.mxu0 %v725
          %739 = vmatpush.msra.mxu0 %v724
          %740 = vmatpush.msra.mxu0 %v723
          %741 = vmatpush.msra.mxu0 %v722
          %742 = vmatpush.msra.mxu0 %v721
          %743 = vmatpush.msra.mxu0 %v720
          %744 = vmatpush.msra.mxu0 %v719
          %745 = vmatpush.msra.mxu0 %v718
          %746 = vmatpush.msra.mxu0 %v717
          %747 = vmatpush.msra.mxu0 %v716
          %748 = vmatpush.msra.mxu0 %v715
          %749 = vmatpush.msra.mxu0 %v714
          %750 = vmatmul.f32.gmra.mxu0 %v691
          %v751 = vpop.f32.mrf.mxu0
          %v752 = vadd.f32 %v732, %v751
          %753 = vmatmul.f32.gmra.mxu0 %v694
          %v754 = vpop.f32.mrf.mxu0
          %v755 = vadd.f32 %v732, %v754
          %756 = vmatmul.f32.gmra.mxu0 %v697
          %v757 = vpop.f32.mrf.mxu0
          %v758 = vadd.f32 %v732, %v757
          %759 = vmatmul.f32.gmra.mxu0 %v700
          %v760 = vpop.f32.mrf.mxu0
          %v761 = vadd.f32 %v732, %v760
          %762 = vmatmul.f32.gmra.mxu0 %v703
          %v763 = vpop.f32.mrf.mxu0
          %v764 = vadd.f32 %v732, %v763
          %765 = vmatmul.f32.gmra.mxu0 %v706
          %v766 = vpop.f32.mrf.mxu0
          %v767 = vadd.f32 %v732, %v766
          %768 = vmatmul.f32.gmra.mxu0 %v709
          %v769 = vpop.f32.mrf.mxu0
          %v770 = vadd.f32 %v732, %v769
          %771 = vmatmul.f32.gmra.mxu0 %v712
          %v772 = vpop.f32.mrf.mxu0
          %v773 = vadd.f32 %v732, %v772
          %774 = vdwg.mxu0
          %v775 = vmax.f32 %v752, 0.0
          %v776 = vmax.f32 %v755, 0.0
          %v777 = vmax.f32 %v758, 0.0
          %v778 = vmax.f32 %v761, 0.0
          %v779 = vmax.f32 %v764, 0.0
          %v780 = vmax.f32 %v767, 0.0
          %v781 = vmax.f32 %v770, 0.0
          %v782 = vmax.f32 %v773, 0.0
          %v783 = vld [vmem:[#allocation15] sm:$0xff]
          %v784 = vld [vmem:[#allocation15 + $0x8] sm:$0xff]
          %v785 = vld [vmem:[#allocation15 + $0x10] sm:$0xff]
          %v786 = vld [vmem:[#allocation15 + $0x18] sm:$0xff]
          %v787 = vld [vmem:[#allocation15 + $0x20] sm:$0xff]
          %v788 = vld [vmem:[#allocation15 + $0x28] sm:$0xff]
          %v789 = vld [vmem:[#allocation15 + $0x30] sm:$0xff]
          %v790 = vld [vmem:[#allocation15 + $0x38] sm:$0xff]
          %v791 = vld [vmem:[#allocation15 + $0x40] sm:$0xff]
          %v792 = vld [vmem:[#allocation15 + $0x48] sm:$0xff]
          %v793 = vld [vmem:[#allocation15 + $0x50] sm:$0xff]
          %v794 = vld [vmem:[#allocation15 + $0x58] sm:$0xff]
          %v795 = vld [vmem:[#allocation15 + $0x60] sm:$0xff]
          %v796 = vld [vmem:[#allocation15 + $0x68] sm:$0xff]
          %v797 = vld [vmem:[#allocation15 + $0x70] sm:$0xff]
          %v798 = vld [vmem:[#allocation15 + $0x78] sm:$0xff]
          %v799 = vld [vmem:[%s10] sm:$0x1]
          %v801 = vperm.slane %v799, 0
          %803 = vmatpush.msra.mxu0 %v798
          %804 = vmatpush.msra.mxu0 %v797
          %805 = vmatpush.msra.mxu0 %v796
          %806 = vmatpush.msra.mxu0 %v795
          %807 = vmatpush.msra.mxu0 %v794
          %808 = vmatpush.msra.mxu0 %v793
          %809 = vmatpush.msra.mxu0 %v792
          %810 = vmatpush.msra.mxu0 %v791
          %811 = vmatpush.msra.mxu0 %v790
          %812 = vmatpush.msra.mxu0 %v789
          %813 = vmatpush.msra.mxu0 %v788
          %814 = vmatpush.msra.mxu0 %v787
          %815 = vmatpush.msra.mxu0 %v786
          %816 = vmatpush.msra.mxu0 %v785
          %817 = vmatpush.msra.mxu0 %v784
          %818 = vmatpush.msra.mxu0 %v783
          %819 = vmatmul.f32.gmra.mxu0 %v775
          %v820 = vpop.f32.mrf.mxu0
          %v821 = vadd.f32 %v801, %v820
          %822 = vmatmul.f32.gmra.mxu0 %v776
          %v823 = vpop.f32.mrf.mxu0
          %v824 = vadd.f32 %v801, %v823
          %825 = vmatmul.f32.gmra.mxu0 %v777
          %v826 = vpop.f32.mrf.mxu0
          %v827 = vadd.f32 %v801, %v826
          %828 = vmatmul.f32.gmra.mxu0 %v778
          %v829 = vpop.f32.mrf.mxu0
          %v830 = vadd.f32 %v801, %v829
          %831 = vmatmul.f32.gmra.mxu0 %v779
          %v832 = vpop.f32.mrf.mxu0
          %v833 = vadd.f32 %v801, %v832
          %834 = vmatmul.f32.gmra.mxu0 %v780
          %v835 = vpop.f32.mrf.mxu0
          %v836 = vadd.f32 %v801, %v835
          %837 = vmatmul.f32.gmra.mxu0 %v781
          %v838 = vpop.f32.mrf.mxu0
          %v839 = vadd.f32 %v801, %v838
          %840 = vmatmul.f32.gmra.mxu0 %v782
          %v841 = vpop.f32.mrf.mxu0
          %v842 = vadd.f32 %v801, %v841
          %843 = vdwg.mxu0
          %s844 = smul.u32 %s32, 16
          %v845 = vld [vmem:[#allocation10] sm:$0xff]
          %v846 = vld [vmem:[#allocation10 + $0x8] sm:$0xff]
          %vm847 = vcmask 523264
          %v849 = vsel %vm847, %v845, 0
          %v852 = vsel %vm847, %v846, 0
          %854 = vmatpush.msra.mxu0 0.0
          %855 = vmatpush.msra.mxu0 0.0
          %856 = vmatpush.msra.mxu0 0.0
          %857 = vmatpush.msra.mxu0 0.0
          %858 = vmatpush.msra.mxu0 0.0
          %859 = vmatpush.msra.mxu0 0.0
          %860 = vmatpush.msra.mxu0 0.0
          %861 = vmatpush.msra.mxu0 0.0
          %862 = vmatpush.msra.mxu0 %v842
          %863 = vmatpush.msra.mxu0 %v839
          %864 = vmatpush.msra.mxu0 %v836
          %865 = vmatpush.msra.mxu0 %v833
          %866 = vmatpush.msra.mxu0 %v830
          %867 = vmatpush.msra.mxu0 %v827
          %868 = vmatpush.msra.mxu0 %v824
          %869 = vmatpush.msra.mxu0 %v821
          %870 = vmatmul.f32.gmra.mxu0 %v849
          %v871 = vpop.f32.mrf.mxu0
          %v872 = vadd.f32 0.0, %v871
          %873 = vmatmul.f32.gmra.mxu0 %v852
          %v874 = vpop.f32.mrf.mxu0
          %v875 = vadd.f32 0.0, %v874
          %876 = vdwg.mxu0
          %s877 = scalar_lea.vmem [#allocation3], %s844
          %878 = vst [vmem:[%s877] sm:$0xff] %v872
          %879 = vst [vmem:[%s877 + $0x8] sm:$0xff] %v875
          %p880 = scmp.eq.s32.totalorder %s32, 1
          // Predicated region
          $region101: #{tpu_custom_call.1} parent=99 // pred_check
            %p881 = pneg %p880
          $region102: #{tpu_custom_call.1} parent=99 // pred_check_branch
            %883 = sbr.rel (%p881) target = $region104
          $region103: #{tpu_custom_call.1} parent=99 // pred_region
            %v884 = vld [vmem:[#allocation9] sm:$0xff]
            %vm885 = vcmask 261120
            %v886 = vsel %vm885, %v884, 0.0
            %887 = vadd.xlane.f32.xlu0 %v886
            %v888 = vpop.xlane.xlu0 %887
            %v889 = vadd.f32 %v888, 0.0001
            %v890 = vrcp.pop %v889
            %v891 = vmul.f32 %v889, %v890
            %v892 = vsub.f32 1.0, %v891
            %v893 = vmul.f32 %v890, %v892
            %v894 = vadd.f32 %v890, %v893
            %vm895 = vweird.f32 %v889
            %vm896 = vweird.f32 %v890
            %vm897 = vmor %vm895, %vm896
            %v898 = vsel %vm897, %v890, %v894
            %v899 = vand.u32 2147483647, %v889
            %vm900 = vcmp.eq.f32.partialorder %v899, 8.507059e+37
            %v901 = vand.u32 %v889, 2147483648
            %v902 = vor.u32 1.1754944e-38, %v901
            %v903 = vsel %vm900, %v902, %v898
            %v904 = vmul.f32 %v884, %v903
            %v905 = vld [vmem:[#allocation3] sm:$0xff]
            %v906 = vld [vmem:[#allocation3 + $0x8] sm:$0xff]
            %v907 = vld [vmem:[#allocation3 + $0x10] sm:$0xff]
            %v908 = vld [vmem:[#allocation3 + $0x18] sm:$0xff]
            %v910 = vsel %vm885, %v904, 0
            %912 = vmatpush.msra.mxu0 0.0
            %913 = vmatpush.msra.mxu0 0.0
            %914 = vmatpush.msra.mxu0 0.0
            %915 = vmatpush.msra.mxu0 0.0
            %916 = vmatpush.msra.mxu0 0.0
            %917 = vmatpush.msra.mxu0 0.0
            %918 = vmatpush.msra.mxu0 0.0
            %919 = vmatpush.msra.mxu0 0.0
            %920 = vmatpush.msra.mxu0 0.0
            %921 = vmatpush.msra.mxu0 0.0
            %922 = vmatpush.msra.mxu0 0.0
            %923 = vmatpush.msra.mxu0 0.0
            %924 = vmatpush.msra.mxu0 %v908
            %925 = vmatpush.msra.mxu0 %v907
            %926 = vmatpush.msra.mxu0 %v906
            %927 = vmatpush.msra.mxu0 %v905
            %928 = vmatmul.f32.gmra.mxu0 %v910
            %v929 = vpop.f32.mrf.mxu0
            %v930 = vadd.f32 0.0, %v929
            %931 = vdwg.mxu0
            %932 = vst [vmem:[#allocation16] sm:$0xff] %v930
          $region104: #{tpu_custom_call.1} parent=99 // pred_fallthru
            _
        $region100: #{tpu_custom_call.1} parent=63 // pred_fallthru
          _
        // Predicated region
        $region105: #{tpu_custom_call.1} parent=63 // pred_check
          %p933 = pneg %p283
        $region106: #{tpu_custom_call.1} parent=63 // pred_check_branch
          %935 = sbr.rel (%p933) target = $region108
        $region107: #{tpu_custom_call.1} parent=63 // pred_region
          %937 = vsyncadd [#allocation6], 0
          %s939 = sshll.u32 [#allocation16], 4
          %s940 = int_to_ptr.vmem [resolvable:$true] %s939
          %s941 = sshll.u32 %s11, 4
          %s942 = int_to_ptr.hbm [resolvable:$true] %s941
          %944 = dma.vmem_to_hbm [thread:$0]  %s940, 128, %s942, [#allocation6]
        $region108: #{tpu_custom_call.1} parent=63 // pred_fallthru
          _
        // Predicated region
        $region109: #{tpu_custom_call.1} parent=63 // pred_check
          %p945 = pneg %p283
        $region110: #{tpu_custom_call.1} parent=63 // pred_check_branch
          %947 = sbr.rel (%p945) target = $region112
        $region111: #{tpu_custom_call.1} parent=63 // pred_region
          %949 = dma.done [#allocation6], 128
        $region112: #{tpu_custom_call.1} parent=63 // pred_fallthru
          _
      $region64: #{tpu_custom_call.1} parent=5 // pred_fallthru
        _
      %p950 = scmp.le.s32.totalorder 2, %s22
      // Predicated region
      $region113: #{tpu_custom_call.1} parent=5 // pred_check
        %p951 = pneg %p950
      $region114: #{tpu_custom_call.1} parent=5 // pred_check_branch
        %953 = sbr.rel (%p951) target = $region116
      $region115: #{tpu_custom_call.1} parent=5 // pred_region
        %s954 = ssub.s32 %s22, 2
      $region116: #{tpu_custom_call.1} parent=5 // pred_fallthru
        _
    $region6: #{tpu_custom_call.1} parent=1 // loop_footer
      %s26 = sadd.s32 1, %s22
    $region7: #{tpu_custom_call.1} parent=1 // loop_footer_branch
      %21 = sbr.rel target = $region3
    $region8: #{tpu_custom_call.1} parent=1 // loop_exit
      _
    %955 = vsyncpa [#allocation5], 1
    %s956 = scalar_lea.sflag [#allocation5], 1
    %957 = vsyncpa %s956, 1
    %958 = vsyncpa [#allocation8], 1
    %959 = vsyncpa [#allocation11], 1
    %960 = vsyncpa [#allocation14], 1
    %961 = vsyncpa [#allocation6], 1
    %s962 = scalar_lea.sflag [#allocation6], 1
    %963 = vsyncpa %s962, 1

</llo_original>
